<compile_context>
chip_gen: v7x
topology: tpu7x:2x2x1
jax: 0.10.0
libtpu: 0.0.40
codegen_flags: <defaults>
</compile_context>

<pallas_src>
import jax
import jax.numpy as jnp
from jax.experimental import pallas as pl
from jax.experimental.pallas import tpu as pltpu


def _full_connector_kernel(
    x_ref,
    w1_ref, b1_ref,
    w2_ref, b2_ref,
    w3_ref, b3_ref,
    w4_ref, b4_ref,
    o_ref,
):
    cdt = w1_ref.dtype  # MXU input dtype (f32 or bf16); accumulation is always f32.

    # fc1 (+ folded bn1) + relu   (dropout = identity in eval mode)
    h = jnp.dot(x_ref[...].astype(cdt), w1_ref[...],
                preferred_element_type=jnp.float32)
    h = jnp.maximum(h + b1_ref[...], 0.0)

    # fc2 (+ folded bn2) + relu
    h = jnp.dot(h.astype(cdt), w2_ref[...], preferred_element_type=jnp.float32)
    h = jnp.maximum(h + b2_ref[...], 0.0)

    # fc3 (+ folded bn3) + relu
    h = jnp.dot(h.astype(cdt), w3_ref[...], preferred_element_type=jnp.float32)
    h = jnp.maximum(h + b3_ref[...], 0.0)

    # fc4 (no activation)
    h = jnp.dot(h.astype(cdt), w4_ref[...], preferred_element_type=jnp.float32)
    o_ref[...] = (h + b4_ref[...]).astype(o_ref.dtype)


def _fold_bn_into_linear(params, compute_dtype):
    """Fold eval-mode BatchNorm (scale, shift) into the preceding Linear."""
    folded = {}
    for li in range(1, 4):
        w = params[f"w{li}"] * params[f"s{li}"]                       # (fin,fout)*(1,fout)
        b = params[f"b{li}"] * params[f"s{li}"] + params[f"t{li}"]    # (1,fout)
        folded[f"w{li}"] = w.astype(compute_dtype)
        folded[f"b{li}"] = b.astype(jnp.float32)  # biases stay f32 (f32 epilogue)
    folded["w4"] = params["w4"].astype(compute_dtype)
    folded["b4"] = params["b4"].astype(jnp.float32)
    return folded


def _round_up(v, m):
    return ((v + m - 1) // m) * m


def _choose_tile(B, tile_b, align, max_tile=4096):
    """Pick the batch tile.

    Adaptive default: biggest tile <= max_tile, but split so the grid has
    >= 2 steps when B is large enough (v7x megacore sharding of the
    "parallel" batch axis). Tiny batches collapse to one full-extent block.
    """
    if tile_b is not None:
        if tile_b >= B:
            return B                      # full-extent block (always layout-legal)
        return _round_up(tile_b, align)
    if B <= 2 * align:
        return B
    return min(max_tile, _round_up(pl.cdiv(B, 2), align))


def full_connector_forward(x, params, *, tile_b=None, compute_dtype=jnp.bfloat16):
    """x: (B, in_features). params: dict from init_params().

    compute_dtype: jnp.bfloat16 (default; MXU-native on v5e/v6e/v7x, f32
    accumulation and f32 epilogue) or jnp.float32 (exact). x itself is NOT
    cast in the wrapper — it is cast to compute_dtype inside the kernel, so
    no extra HBM copy of the activation tensor is materialized.
    """
    B, IN = x.shape
    OUT = params["w4"].shape[1]

    align = 16 if compute_dtype == jnp.bfloat16 else 8
    tb = _choose_tile(B, tile_b, align)
    grid_b = pl.cdiv(B, tb)   # ragged last block handled by Pallas (no host pad)

    folded = _fold_bn_into_linear(params, compute_dtype)

    param_order = ["w1", "b1", "w2", "b2", "w3", "b3", "w4", "b4"]
    args = [x] + [folded[name] for name in param_order]

    def const_spec(shape):
        # Full-array block; constant index_map -> Pallas keeps it resident in
        # VMEM and does not re-fetch it across batch-grid steps.
        return pl.BlockSpec(shape, lambda i: (0, 0))

    in_specs = [pl.BlockSpec((tb, IN), lambda i: (i, 0))]
    in_specs += [const_spec(folded[name].shape) for name in param_order]
    out_spec = pl.BlockSpec((tb, OUT), lambda i: (i, 0))

    flops = 2 * B * (IN * 256 + 256 * 32 + 32 * 8 + 8 * OUT)
    weight_bytes = sum(int(v.size) * v.dtype.itemsize for v in folded.values())
    bytes_accessed = B * IN * x.dtype.itemsize + B * OUT * 4 + weight_bytes

    return pl.pallas_call(
        _full_connector_kernel,
        out_shape=jax.ShapeDtypeStruct((B, OUT), jnp.float32),
        grid_spec=pl.GridSpec(
            grid=(grid_b,),
            in_specs=in_specs,
            out_specs=out_spec,
        ),
        compiler_params=pltpu.CompilerParams(
            dimension_semantics=("parallel",),
            vmem_limit_bytes=32 * 1024 * 1024,
        ),
        cost_estimate=pl.CostEstimate(
            flops=flops, transcendentals=0, bytes_accessed=bytes_accessed),
    )(*args)


def init_params(key, in_features, out_features):
    """Deterministic synthetic parameters matching the PyTorch module's shapes."""
    dims = [(in_features, 256), (256, 32), (32, 8), (8, out_features)]
    params = {}
    keys = jax.random.split(key, 16)
    ki = 0
    eps = 1e-5
    for li, (fin, fout) in enumerate(dims, start=1):
        bound = 1.0 / jnp.sqrt(jnp.float32(fin))
        # nn.Linear weight is (fout, fin); store pre-transposed (fin, fout).
        w = jax.random.uniform(keys[ki], (fin, fout), jnp.float32, -bound, bound); ki += 1
        b = jax.random.uniform(keys[ki], (1, fout), jnp.float32, -bound, bound); ki += 1
        params[f"w{li}"] = w
        params[f"b{li}"] = b
        if li < 4:
            # BatchNorm1d(fout): gamma, beta, running_mean, running_var (eval mode)
            gamma = 1.0 + 0.1 * jax.random.normal(keys[ki], (1, fout), jnp.float32); ki += 1
            beta = 0.1 * jax.random.normal(keys[ki], (1, fout), jnp.float32); ki += 1
            running_mean = 0.05 * jnp.arange(fout, dtype=jnp.float32).reshape(1, fout)
            running_var = 1.0 + 0.01 * jnp.arange(fout, dtype=jnp.float32).reshape(1, fout)
            scale = gamma / jnp.sqrt(running_var + eps)
            shift = beta - running_mean * scale
            params[f"s{li}"] = scale
            params[f"t{li}"] = shift
    return params


def reference_forward(x, params):
    """Plain-JAX f32 reference of the same eval-mode forward (BN not folded)."""
    h = x
    for li in range(1, 4):
        h = h @ params[f"w{li}"] + params[f"b{li}"]
        h = h * params[f"s{li}"] + params[f"t{li}"]
        h = jnp.maximum(h, 0.0)
    return h @ params["w4"] + params["b4"]


if __name__ == "__main__":
    key = jax.random.PRNGKey(0)
    k_param, k_x1, k_x2 = jax.random.split(key, 3)

    in_features = 64
    out_features = 4
    params = init_params(k_param, in_features, out_features)

    # 1) f32 path (exact), adaptive tiling -> 2-step "parallel" batch grid.
    B1 = 256
    x1 = jax.random.normal(k_x1, (B1, in_features), jnp.float32)
    out1 = jax.block_until_ready(
        full_connector_forward(x1, params, compute_dtype=jnp.float32))
    ref1 = reference_forward(x1, params)
    assert out1.shape == (B1, out_features)
    assert jnp.allclose(out1, ref1, atol=1e-4, rtol=1e-4), "f32 mismatch vs reference"

    # 2) f32 path, explicit tile with a ragged (partial) last block, no host-side pad.
    B2 = 300
    x2 = jax.random.normal(k_x2, (B2, in_features), jnp.float32)
    out2 = jax.block_until_ready(
        full_connector_forward(x2, params, tile_b=128, compute_dtype=jnp.float32))
    ref2 = reference_forward(x2, params)
    assert out2.shape == (B2, out_features)
    assert jnp.allclose(out2, ref2, atol=1e-4, rtol=1e-4), "ragged-grid mismatch vs reference"

    # 3) default bf16 weights/intermediates (f32 x in HBM, f32 MXU accumulation).
    out_bf16 = jax.block_until_ready(full_connector_forward(x1, params))
    assert out_bf16.shape == (B1, out_features)
    assert jnp.allclose(out_bf16, ref1, atol=5e-2, rtol=5e-2), "bf16 mismatch vs reference"

    print("KERNEL_OK")
</pallas_src>

<mosaic_0001>
module attributes {stable_mosaic.version = 11 : i64} {
  func.func @_full_connector_kernel(%arg0: i32, %arg1: memref<128x64xf32, #tpu.memory_space<vmem>>, %arg2: memref<64x256xf32, #tpu.memory_space<vmem>>, %arg3: memref<1x256xf32, #tpu.memory_space<vmem>>, %arg4: memref<256x32xf32, #tpu.memory_space<vmem>>, %arg5: memref<1x32xf32, #tpu.memory_space<vmem>>, %arg6: memref<32x8xf32, #tpu.memory_space<vmem>>, %arg7: memref<1x8xf32, #tpu.memory_space<vmem>>, %arg8: memref<8x4xf32, #tpu.memory_space<vmem>>, %arg9: memref<1x4xf32, #tpu.memory_space<vmem>>, %arg10: memref<128x4xf32, #tpu.memory_space<vmem>>) attributes {dimension_semantics = [#tpu.dimension_semantics<parallel>], iteration_bounds = array<i64: 2>, scalar_prefetch = 0 : i64, scratch_operands = 0 : i64, tpu.core_type = #tpu.core_type<tc>, window_params = [{transform_indices = @transform_0, window_bounds = array<i64: 128, 64>}, {pipeline_mode = #tpu.pipeline_mode<synchronous>, transform_indices = @transform_1, window_bounds = array<i64: 64, 256>}, {pipeline_mode = #tpu.pipeline_mode<synchronous>, transform_indices = @transform_2, window_bounds = array<i64: 1, 256>}, {pipeline_mode = #tpu.pipeline_mode<synchronous>, transform_indices = @transform_3, window_bounds = array<i64: 256, 32>}, {pipeline_mode = #tpu.pipeline_mode<synchronous>, transform_indices = @transform_4, window_bounds = array<i64: 1, 32>}, {pipeline_mode = #tpu.pipeline_mode<synchronous>, transform_indices = @transform_5, window_bounds = array<i64: 32, 8>}, {pipeline_mode = #tpu.pipeline_mode<synchronous>, transform_indices = @transform_6, window_bounds = array<i64: 1, 8>}, {pipeline_mode = #tpu.pipeline_mode<synchronous>, transform_indices = @transform_7, window_bounds = array<i64: 8, 4>}, {pipeline_mode = #tpu.pipeline_mode<synchronous>, transform_indices = @transform_8, window_bounds = array<i64: 1, 4>}, {transform_indices = @transform_9, window_bounds = array<i64: 128, 4>}]} {
    %c0 = arith.constant 0 : index
    %c0_0 = arith.constant 0 : index
    %0 = vector.load %arg1[%c0, %c0_0] : memref<128x64xf32, #tpu.memory_space<vmem>>, vector<128x64xf32>
    %c0_1 = arith.constant 0 : index
    %c0_2 = arith.constant 0 : index
    %1 = vector.load %arg2[%c0_1, %c0_2] : memref<64x256xf32, #tpu.memory_space<vmem>>, vector<64x256xf32>
    %cst = arith.constant dense<0.000000e+00> : vector<128x256xf32>
    %2 = tpu.matmul %0, %1, %cst {dimension_numbers = #tpu.dot_dimension_numbers<[1], [0], [0], [1], [0, 0, 1, 1], [], []>} : vector<128x64xf32>, vector<64x256xf32>, vector<128x256xf32> -> vector<128x256xf32>
    %c0_3 = arith.constant 0 : index
    %c0_4 = arith.constant 0 : index
    %3 = vector.load %arg3[%c0_3, %c0_4] : memref<1x256xf32, #tpu.memory_space<vmem>>, vector<1x256xf32>
    %4 = vector.broadcast %3 : vector<1x256xf32> to vector<128x256xf32>
    %5 = arith.addf %2, %4 : vector<128x256xf32>
    %cst_5 = arith.constant 0.000000e+00 : f32
    %6 = vector.broadcast %cst_5 : f32 to vector<128x256xf32>
    %7 = arith.maximumf %5, %6 : vector<128x256xf32>
    %c0_6 = arith.constant 0 : index
    %c0_7 = arith.constant 0 : index
    %8 = vector.load %arg4[%c0_6, %c0_7] : memref<256x32xf32, #tpu.memory_space<vmem>>, vector<256x32xf32>
    %cst_8 = arith.constant dense<0.000000e+00> : vector<128x32xf32>
    %9 = tpu.matmul %7, %8, %cst_8 {dimension_numbers = #tpu.dot_dimension_numbers<[1], [0], [0], [1], [0, 0, 1, 1], [], []>} : vector<128x256xf32>, vector<256x32xf32>, vector<128x32xf32> -> vector<128x32xf32>
    %c0_9 = arith.constant 0 : index
    %c0_10 = arith.constant 0 : index
    %10 = vector.load %arg5[%c0_9, %c0_10] : memref<1x32xf32, #tpu.memory_space<vmem>>, vector<1x32xf32>
    %11 = vector.broadcast %10 : vector<1x32xf32> to vector<128x32xf32>
    %12 = arith.addf %9, %11 : vector<128x32xf32>
    %cst_11 = arith.constant 0.000000e+00 : f32
    %13 = vector.broadcast %cst_11 : f32 to vector<128x32xf32>
    %14 = arith.maximumf %12, %13 : vector<128x32xf32>
    %c0_12 = arith.constant 0 : index
    %c0_13 = arith.constant 0 : index
    %15 = vector.load %arg6[%c0_12, %c0_13] : memref<32x8xf32, #tpu.memory_space<vmem>>, vector<32x8xf32>
    %cst_14 = arith.constant dense<0.000000e+00> : vector<128x8xf32>
    %16 = tpu.matmul %14, %15, %cst_14 {dimension_numbers = #tpu.dot_dimension_numbers<[1], [0], [0], [1], [0, 0, 1, 1], [], []>} : vector<128x32xf32>, vector<32x8xf32>, vector<128x8xf32> -> vector<128x8xf32>
    %c0_15 = arith.constant 0 : index
    %c0_16 = arith.constant 0 : index
    %17 = vector.load %arg7[%c0_15, %c0_16] : memref<1x8xf32, #tpu.memory_space<vmem>>, vector<1x8xf32>
    %18 = vector.broadcast %17 : vector<1x8xf32> to vector<128x8xf32>
    %19 = arith.addf %16, %18 : vector<128x8xf32>
    %cst_17 = arith.constant 0.000000e+00 : f32
    %20 = vector.broadcast %cst_17 : f32 to vector<128x8xf32>
    %21 = arith.maximumf %19, %20 : vector<128x8xf32>
    %c0_18 = arith.constant 0 : index
    %c0_19 = arith.constant 0 : index
    %22 = vector.load %arg8[%c0_18, %c0_19] : memref<8x4xf32, #tpu.memory_space<vmem>>, vector<8x4xf32>
    %cst_20 = arith.constant dense<0.000000e+00> : vector<128x4xf32>
    %23 = tpu.matmul %21, %22, %cst_20 {dimension_numbers = #tpu.dot_dimension_numbers<[1], [0], [0], [1], [0, 0, 1, 1], [], []>} : vector<128x8xf32>, vector<8x4xf32>, vector<128x4xf32> -> vector<128x4xf32>
    %c0_21 = arith.constant 0 : index
    %c0_22 = arith.constant 0 : index
    %24 = vector.load %arg9[%c0_21, %c0_22] : memref<1x4xf32, #tpu.memory_space<vmem>>, vector<1x4xf32>
    %25 = vector.broadcast %24 : vector<1x4xf32> to vector<128x4xf32>
    %26 = arith.addf %23, %25 : vector<128x4xf32>
    %c0_23 = arith.constant 0 : index
    %c0_24 = arith.constant 0 : index
    %27 = vector.load %arg10[%c0_23, %c0_24] : memref<128x4xf32, #tpu.memory_space<vmem>>, vector<128x4xf32>
    tpu.vector_store %arg10[%c0_23, %c0_24], %26 {strides = array<i32>} : memref<128x4xf32, #tpu.memory_space<vmem>>, vector<128x4xf32>,
    return
  }
  func.func @transform_0(%arg0: i32) -> (i32, i32) {
    %c0_i32 = arith.constant 0 : i32
    %c0_i32_0 = arith.constant 0 : i32
    return %arg0, %c0_i32 : i32, i32
  }
  func.func @transform_1(%arg0: i32) -> (i32, i32) {
    %c0_i32 = arith.constant 0 : i32
    %c0_i32_0 = arith.constant 0 : i32
    %c0_i32_1 = arith.constant 0 : i32
    return %c0_i32, %c0_i32_0 : i32, i32
  }
  func.func @transform_2(%arg0: i32) -> (i32, i32) {
    %c0_i32 = arith.constant 0 : i32
    %c0_i32_0 = arith.constant 0 : i32
    %c0_i32_1 = arith.constant 0 : i32
    return %c0_i32, %c0_i32_0 : i32, i32
  }
  func.func @transform_3(%arg0: i32) -> (i32, i32) {
    %c0_i32 = arith.constant 0 : i32
    %c0_i32_0 = arith.constant 0 : i32
    %c0_i32_1 = arith.constant 0 : i32
    return %c0_i32, %c0_i32_0 : i32, i32
  }
  func.func @transform_4(%arg0: i32) -> (i32, i32) {
    %c0_i32 = arith.constant 0 : i32
    %c0_i32_0 = arith.constant 0 : i32
    %c0_i32_1 = arith.constant 0 : i32
    return %c0_i32, %c0_i32_0 : i32, i32
  }
  func.func @transform_5(%arg0: i32) -> (i32, i32) {
    %c0_i32 = arith.constant 0 : i32
    %c0_i32_0 = arith.constant 0 : i32
    %c0_i32_1 = arith.constant 0 : i32
    return %c0_i32, %c0_i32_0 : i32, i32
  }
  func.func @transform_6(%arg0: i32) -> (i32, i32) {
    %c0_i32 = arith.constant 0 : i32
    %c0_i32_0 = arith.constant 0 : i32
    %c0_i32_1 = arith.constant 0 : i32
    return %c0_i32, %c0_i32_0 : i32, i32
  }
  func.func @transform_7(%arg0: i32) -> (i32, i32) {
    %c0_i32 = arith.constant 0 : i32
    %c0_i32_0 = arith.constant 0 : i32
    %c0_i32_1 = arith.constant 0 : i32
    return %c0_i32, %c0_i32_0 : i32, i32
  }
  func.func @transform_8(%arg0: i32) -> (i32, i32) {
    %c0_i32 = arith.constant 0 : i32
    %c0_i32_0 = arith.constant 0 : i32
    %c0_i32_1 = arith.constant 0 : i32
    return %c0_i32, %c0_i32_0 : i32, i32
  }
  func.func @transform_9(%arg0: i32) -> (i32, i32) {
    %c0_i32 = arith.constant 0 : i32
    %c0_i32_0 = arith.constant 0 : i32
    return %arg0, %c0_i32 : i32, i32
  }
}

</mosaic_0001>

<llo_original>
// kernel: tpu_custom_call.1
$region0: #{tpu_custom_call.1}
  #allocation0 [shape = 'u32[]', space=smem, size = 0x4, offset = 0x4, fixed_abs, tag = 'smem constant byte address 0x4 - core index']
  #allocation1 [shape = 'u32[144,128]{1,0:T(1,128)}', space=vmem, size = 0x12000, scoped, tag = 'internal scratch']
  %s0 = inlined_call_operand.vmem [shape: f32[256,64], index: 0, kind: input, shape index: {}]
  %s1 = inlined_call_operand.vmem [shape: f32[64,256], index: 1, kind: input, shape index: {}]
  %s2 = inlined_call_operand.vmem [shape: f32[1,256], index: 2, kind: input, shape index: {}]
  %s3 = inlined_call_operand.vmem [shape: f32[256,32], index: 3, kind: input, shape index: {}]
  %s4 = inlined_call_operand.vmem [shape: f32[1,32], index: 4, kind: input, shape index: {}]
  %s5 = inlined_call_operand.vmem [shape: f32[32,8], index: 5, kind: input, shape index: {}]
  %s6 = inlined_call_operand.vmem [shape: f32[1,8], index: 6, kind: input, shape index: {}]
  %s7 = inlined_call_operand.vmem [shape: f32[8,4], index: 7, kind: input, shape index: {}]
  %s8 = inlined_call_operand.vmem [shape: f32[1,4], index: 8, kind: input, shape index: {}]
  %s9 = inlined_call_operand.vmem [shape: f32[256,4], index: 9, kind: output, shape index: {}]
  %s10 = sld [smem:[#allocation0]]
  $region69: #{tpu_custom_call.1} parent=0
    _
  %s12 = ssub.s32 1, %s10
  %s13 = scalar_select 0, %s12, %s10
  loop: start=0, step=1, limit=4
  $region2: #{tpu_custom_call.1} parent=0 // loop_pre_header
    _
  $region3: #{tpu_custom_call.1} parent=0 // loop_header
    %s15 = sphi 0, %s19
    %p16 = scmp.ge.s32.totalorder %s15, 4
    %s25 = sphi 0, %s27
    %s28 = sphi 0, %s25
    %s29 = sphi 0, %s28
    %s45 = sphi 0, %s29
    %s49 = sphi 0, %s49
    %s51 = sphi 0, %s49
    %s52 = sphi 0, %s51
    %s66 = sphi 0, %s52
    %s70 = sphi 0, %s70
    %s72 = sphi 0, %s70
    %s73 = sphi 0, %s72
    %s87 = sphi 0, %s73
    %s91 = sphi 0, %s91
    %s93 = sphi 0, %s91
    %s94 = sphi 0, %s93
    %s108 = sphi 0, %s94
    %s112 = sphi 0, %s112
    %s114 = sphi 0, %s112
    %s115 = sphi 0, %s114
    %s129 = sphi 0, %s115
    %s133 = sphi 0, %s133
    %s135 = sphi 0, %s133
    %s136 = sphi 0, %s135
    %s150 = sphi 0, %s136
    %s154 = sphi 0, %s154
    %s156 = sphi 0, %s154
    %s157 = sphi 0, %s156
    %s171 = sphi 0, %s157
    %s175 = sphi 0, %s175
    %s177 = sphi 0, %s175
    %s178 = sphi 0, %s177
    %s192 = sphi 0, %s178
    %s196 = sphi 0, %s196
    %s198 = sphi 0, %s196
    %s199 = sphi 0, %s198
    %s213 = sphi 0, %s199
    %s219 = sphi 0, %s221
    %s222 = sphi 0, %s219
    %s223 = sphi 0, %s222
    %s239 = sphi 0, %s223
  $region4: #{tpu_custom_call.1} parent=0 // loop_header_branch
    %18 = sbr.rel (%p16) target = $region8
  $region5: #{tpu_custom_call.1} parent=0 // loop_body
    %s20 = ssub.s32 %s15, 1
    %s21 = ssub.s32 %s15, 2
    %s22 = sadd.s32 %s15, 1
    %s23 = ssub.s32 %s15, %s22
    %p24 = scmp.eq.s32.totalorder %s23, 0
    %s26 = sadd.s32 %s25, 1
    %s27 = scalar_select %p24, %s25, %s26
    %p30 = pneg %p24
    %p31 = scmp.eq.s32.totalorder %s15, 1
    %p32 = por %p30, %p31
    %p33 = scmp.ne.s32.totalorder %s25, %s28
    %p34 = scmp.eq.s32.totalorder %s15, 0
    %p35 = por %p33, %p34
    %p36 = scmp.ne.s32.totalorder %s25, %s28
    %p37 = scmp.eq.s32.totalorder %s20, 1
    %p38 = por %p36, %p37
    %p39 = scmp.ne.s32.totalorder %s28, %s29
    %p40 = scmp.eq.s32.totalorder %s20, 0
    %p41 = por %p39, %p40
    %p42 = scmp.ne.s32.totalorder %s28, %s29
    %p43 = scmp.eq.s32.totalorder %s21, 1
    %p44 = por %p42, %p43
    %p46 = scmp.ne.s32.totalorder %s29, %s45
    %p47 = scmp.eq.s32.totalorder %s21, 0
    %p48 = por %p46, %p47
    %s50 = sadd.s32 %s49, 1
    %p53 = scmp.eq.s32.totalorder %s15, 1
    %p54 = scmp.ne.s32.totalorder %s49, %s51
    %p55 = scmp.eq.s32.totalorder %s15, 0
    %p56 = por %p54, %p55
    %p57 = scmp.ne.s32.totalorder %s49, %s51
    %p58 = scmp.eq.s32.totalorder %s20, 1
    %p59 = por %p57, %p58
    %p60 = scmp.ne.s32.totalorder %s51, %s52
    %p61 = scmp.eq.s32.totalorder %s20, 0
    %p62 = por %p60, %p61
    %p63 = scmp.ne.s32.totalorder %s51, %s52
    %p64 = scmp.eq.s32.totalorder %s21, 1
    %p65 = por %p63, %p64
    %p67 = scmp.ne.s32.totalorder %s52, %s66
    %p68 = scmp.eq.s32.totalorder %s21, 0
    %p69 = por %p67, %p68
    %s71 = sadd.s32 %s70, 1
    %p74 = scmp.eq.s32.totalorder %s15, 1
    %p75 = scmp.ne.s32.totalorder %s70, %s72
    %p76 = scmp.eq.s32.totalorder %s15, 0
    %p77 = por %p75, %p76
    %p78 = scmp.ne.s32.totalorder %s70, %s72
    %p79 = scmp.eq.s32.totalorder %s20, 1
    %p80 = por %p78, %p79
    %p81 = scmp.ne.s32.totalorder %s72, %s73
    %p82 = scmp.eq.s32.totalorder %s20, 0
    %p83 = por %p81, %p82
    %p84 = scmp.ne.s32.totalorder %s72, %s73
    %p85 = scmp.eq.s32.totalorder %s21, 1
    %p86 = por %p84, %p85
    %p88 = scmp.ne.s32.totalorder %s73, %s87
    %p89 = scmp.eq.s32.totalorder %s21, 0
    %p90 = por %p88, %p89
    %s92 = sadd.s32 %s91, 1
    %p95 = scmp.eq.s32.totalorder %s15, 1
    %p96 = scmp.ne.s32.totalorder %s91, %s93
    %p97 = scmp.eq.s32.totalorder %s15, 0
    %p98 = por %p96, %p97
    %p99 = scmp.ne.s32.totalorder %s91, %s93
    %p100 = scmp.eq.s32.totalorder %s20, 1
    %p101 = por %p99, %p100
    %p102 = scmp.ne.s32.totalorder %s93, %s94
    %p103 = scmp.eq.s32.totalorder %s20, 0
    %p104 = por %p102, %p103
    %p105 = scmp.ne.s32.totalorder %s93, %s94
    %p106 = scmp.eq.s32.totalorder %s21, 1
    %p107 = por %p105, %p106
    %p109 = scmp.ne.s32.totalorder %s94, %s108
    %p110 = scmp.eq.s32.totalorder %s21, 0
    %p111 = por %p109, %p110
    %s113 = sadd.s32 %s112, 1
    %p116 = scmp.eq.s32.totalorder %s15, 1
    %p117 = scmp.ne.s32.totalorder %s112, %s114
    %p118 = scmp.eq.s32.totalorder %s15, 0
    %p119 = por %p117, %p118
    %p120 = scmp.ne.s32.totalorder %s112, %s114
    %p121 = scmp.eq.s32.totalorder %s20, 1
    %p122 = por %p120, %p121
    %p123 = scmp.ne.s32.totalorder %s114, %s115
    %p124 = scmp.eq.s32.totalorder %s20, 0
    %p125 = por %p123, %p124
    %p126 = scmp.ne.s32.totalorder %s114, %s115
    %p127 = scmp.eq.s32.totalorder %s21, 1
    %p128 = por %p126, %p127
    %p130 = scmp.ne.s32.totalorder %s115, %s129
    %p131 = scmp.eq.s32.totalorder %s21, 0
    %p132 = por %p130, %p131
    %s134 = sadd.s32 %s133, 1
    %p137 = scmp.eq.s32.totalorder %s15, 1
    %p138 = scmp.ne.s32.totalorder %s133, %s135
    %p139 = scmp.eq.s32.totalorder %s15, 0
    %p140 = por %p138, %p139
    %p141 = scmp.ne.s32.totalorder %s133, %s135
    %p142 = scmp.eq.s32.totalorder %s20, 1
    %p143 = por %p141, %p142
    %p144 = scmp.ne.s32.totalorder %s135, %s136
    %p145 = scmp.eq.s32.totalorder %s20, 0
    %p146 = por %p144, %p145
    %p147 = scmp.ne.s32.totalorder %s135, %s136
    %p148 = scmp.eq.s32.totalorder %s21, 1
    %p149 = por %p147, %p148
    %p151 = scmp.ne.s32.totalorder %s136, %s150
    %p152 = scmp.eq.s32.totalorder %s21, 0
    %p153 = por %p151, %p152
    %s155 = sadd.s32 %s154, 1
    %p158 = scmp.eq.s32.totalorder %s15, 1
    %p159 = scmp.ne.s32.totalorder %s154, %s156
    %p160 = scmp.eq.s32.totalorder %s15, 0
    %p161 = por %p159, %p160
    %p162 = scmp.ne.s32.totalorder %s154, %s156
    %p163 = scmp.eq.s32.totalorder %s20, 1
    %p164 = por %p162, %p163
    %p165 = scmp.ne.s32.totalorder %s156, %s157
    %p166 = scmp.eq.s32.totalorder %s20, 0
    %p167 = por %p165, %p166
    %p168 = scmp.ne.s32.totalorder %s156, %s157
    %p169 = scmp.eq.s32.totalorder %s21, 1
    %p170 = por %p168, %p169
    %p172 = scmp.ne.s32.totalorder %s157, %s171
    %p173 = scmp.eq.s32.totalorder %s21, 0
    %p174 = por %p172, %p173
    %s176 = sadd.s32 %s175, 1
    %p179 = scmp.eq.s32.totalorder %s15, 1
    %p180 = scmp.ne.s32.totalorder %s175, %s177
    %p181 = scmp.eq.s32.totalorder %s15, 0
    %p182 = por %p180, %p181
    %p183 = scmp.ne.s32.totalorder %s175, %s177
    %p184 = scmp.eq.s32.totalorder %s20, 1
    %p185 = por %p183, %p184
    %p186 = scmp.ne.s32.totalorder %s177, %s178
    %p187 = scmp.eq.s32.totalorder %s20, 0
    %p188 = por %p186, %p187
    %p189 = scmp.ne.s32.totalorder %s177, %s178
    %p190 = scmp.eq.s32.totalorder %s21, 1
    %p191 = por %p189, %p190
    %p193 = scmp.ne.s32.totalorder %s178, %s192
    %p194 = scmp.eq.s32.totalorder %s21, 0
    %p195 = por %p193, %p194
    %s197 = sadd.s32 %s196, 1
    %p200 = scmp.eq.s32.totalorder %s15, 1
    %p201 = scmp.ne.s32.totalorder %s196, %s198
    %p202 = scmp.eq.s32.totalorder %s15, 0
    %p203 = por %p201, %p202
    %p204 = scmp.ne.s32.totalorder %s196, %s198
    %p205 = scmp.eq.s32.totalorder %s20, 1
    %p206 = por %p204, %p205
    %p207 = scmp.ne.s32.totalorder %s198, %s199
    %p208 = scmp.eq.s32.totalorder %s20, 0
    %p209 = por %p207, %p208
    %p210 = scmp.ne.s32.totalorder %s198, %s199
    %p211 = scmp.eq.s32.totalorder %s21, 1
    %p212 = por %p210, %p211
    %p214 = scmp.ne.s32.totalorder %s199, %s213
    %p215 = scmp.eq.s32.totalorder %s21, 0
    %p216 = por %p214, %p215
    %s217 = ssub.s32 %s15, %s22
    %p218 = scmp.eq.s32.totalorder %s217, 0
    %s220 = sadd.s32 %s219, 1
    %s221 = scalar_select %p218, %s219, %s220
    %p224 = pneg %p218
    %p225 = scmp.eq.s32.totalorder %s15, 1
    %p226 = por %p224, %p225
    %p227 = scmp.ne.s32.totalorder %s219, %s222
    %p228 = scmp.eq.s32.totalorder %s15, 0
    %p229 = por %p227, %p228
    %p230 = scmp.ne.s32.totalorder %s219, %s222
    %p231 = scmp.eq.s32.totalorder %s20, 1
    %p232 = por %p230, %p231
    %p233 = scmp.ne.s32.totalorder %s222, %s223
    %p234 = scmp.eq.s32.totalorder %s20, 0
    %p235 = por %p233, %p234
    %p236 = scmp.ne.s32.totalorder %s222, %s223
    %p237 = scmp.eq.s32.totalorder %s21, 1
    %p238 = por %p236, %p237
    %p240 = scmp.ne.s32.totalorder %s223, %s239
    %p241 = scmp.eq.s32.totalorder %s21, 0
    %p242 = por %p240, %p241
    %p243 = scmp.le.s32.totalorder 1, %s15
    %p244 = scmp.lt.s32.totalorder %s15, 3
    %p245 = pnand %p243, %p244
    %p246 = pneg %p245
    // Predicated region
    $region9: #{tpu_custom_call.1} parent=5 // pred_check
      _
    $region10: #{tpu_custom_call.1} parent=5 // pred_check_branch
      %248 = sbr.rel (%p245) target = $region12
    $region11: #{tpu_custom_call.1} parent=5 // pred_region
      %s249 = ssub.s32 %s15, 1
      // Predicated region
      $region13: #{tpu_custom_call.1} parent=11 // pred_check
        %p250 = pneg %p62
      $region14: #{tpu_custom_call.1} parent=11 // pred_check_branch
        %252 = sbr.rel (%p250) target = $region16
      $region15: #{tpu_custom_call.1} parent=11 // pred_region
        _
      $region16: #{tpu_custom_call.1} parent=11 // pred_fallthru
        _
      // Predicated region
      $region17: #{tpu_custom_call.1} parent=11 // pred_check
        %p253 = pneg %p83
      $region18: #{tpu_custom_call.1} parent=11 // pred_check_branch
        %255 = sbr.rel (%p253) target = $region20
      $region19: #{tpu_custom_call.1} parent=11 // pred_region
        _
      $region20: #{tpu_custom_call.1} parent=11 // pred_fallthru
        _
      // Predicated region
      $region21: #{tpu_custom_call.1} parent=11 // pred_check
        %p256 = pneg %p104
      $region22: #{tpu_custom_call.1} parent=11 // pred_check_branch
        %258 = sbr.rel (%p256) target = $region24
      $region23: #{tpu_custom_call.1} parent=11 // pred_region
        _
      $region24: #{tpu_custom_call.1} parent=11 // pred_fallthru
        _
      // Predicated region
      $region25: #{tpu_custom_call.1} parent=11 // pred_check
        %p259 = pneg %p125
      $region26: #{tpu_custom_call.1} parent=11 // pred_check_branch
        %261 = sbr.rel (%p259) target = $region28
      $region27: #{tpu_custom_call.1} parent=11 // pred_region
        _
      $region28: #{tpu_custom_call.1} parent=11 // pred_fallthru
        _
      // Predicated region
      $region29: #{tpu_custom_call.1} parent=11 // pred_check
        %p262 = pneg %p146
      $region30: #{tpu_custom_call.1} parent=11 // pred_check_branch
        %264 = sbr.rel (%p262) target = $region32
      $region31: #{tpu_custom_call.1} parent=11 // pred_region
        _
      $region32: #{tpu_custom_call.1} parent=11 // pred_fallthru
        _
      // Predicated region
      $region33: #{tpu_custom_call.1} parent=11 // pred_check
        %p265 = pneg %p167
      $region34: #{tpu_custom_call.1} parent=11 // pred_check_branch
        %267 = sbr.rel (%p265) target = $region36
      $region35: #{tpu_custom_call.1} parent=11 // pred_region
        _
      $region36: #{tpu_custom_call.1} parent=11 // pred_fallthru
        _
      // Predicated region
      $region37: #{tpu_custom_call.1} parent=11 // pred_check
        %p268 = pneg %p188
      $region38: #{tpu_custom_call.1} parent=11 // pred_check_branch
        %270 = sbr.rel (%p268) target = $region40
      $region39: #{tpu_custom_call.1} parent=11 // pred_region
        _
      $region40: #{tpu_custom_call.1} parent=11 // pred_fallthru
        _
      // Predicated region
      $region41: #{tpu_custom_call.1} parent=11 // pred_check
        %p271 = pneg %p209
      $region42: #{tpu_custom_call.1} parent=11 // pred_check_branch
        %273 = sbr.rel (%p271) target = $region44
      $region43: #{tpu_custom_call.1} parent=11 // pred_region
        _
      $region44: #{tpu_custom_call.1} parent=11 // pred_fallthru
        _
    $region12: #{tpu_custom_call.1} parent=5 // pred_fallthru
      _
    %p274 = scmp.lt.s32.totalorder %s15, 2
    // Predicated region
    $region45: #{tpu_custom_call.1} parent=5 // pred_check
      %p275 = pneg %p274
    $region46: #{tpu_custom_call.1} parent=5 // pred_check_branch
      %277 = sbr.rel (%p275) target = $region48
    $region47: #{tpu_custom_call.1} parent=5 // pred_region
      // Predicated region
      $region49: #{tpu_custom_call.1} parent=47 // pred_check
        %p278 = pneg %p35
      $region50: #{tpu_custom_call.1} parent=47 // pred_check_branch
        %280 = sbr.rel (%p278) target = $region52
      $region51: #{tpu_custom_call.1} parent=47 // pred_region
        %s281 = smul.u32 16, %s15
        %p282 = scmp.lt.s32.totalorder %s281, 31
        %s283 = scalar_select %p282, %s281, 31
        %s284 = smul.addr %s283, 8
        %s285 = scalar_lea.vmem %s0, %s284
        %s286 = smul.u32 16, %s15
      $region52: #{tpu_custom_call.1} parent=47 // pred_fallthru
        _
    $region48: #{tpu_custom_call.1} parent=5 // pred_fallthru
      _
    %p287 = scmp.le.s32.totalorder 1, %s15
    %p288 = scmp.lt.s32.totalorder %s15, 3
    %p289 = pnand %p287, %p288
    %p290 = pneg %p289
    // Predicated region
    $region53: #{tpu_custom_call.1} parent=5 // pred_check
      _
    $region54: #{tpu_custom_call.1} parent=5 // pred_check_branch
      %292 = sbr.rel (%p289) target = $region56
    $region55: #{tpu_custom_call.1} parent=5 // pred_region
      %s293 = ssub.s32 %s15, 1
      %s294 = smul.u32 16, %s20
      %p295 = scmp.lt.s32.totalorder %s294, 31
      %s296 = scalar_select %p295, %s294, 31
      %s297 = smul.addr %s296, 8
      %s298 = scalar_lea.vmem %s0, %s297
      %p299 = pneg %p41
      %p300 = pneg %p38
      %p301 = pneg %p62
      %p302 = pneg %p59
      %p303 = pneg %p83
      %p304 = pneg %p80
      %p305 = pneg %p104
      %p306 = pneg %p101
      %p307 = pneg %p125
      %p308 = pneg %p122
      %p309 = pneg %p146
      %p310 = pneg %p143
      %p311 = pneg %p167
      %p312 = pneg %p164
      %p313 = pneg %p188
      %p314 = pneg %p185
      %p315 = pneg %p209
      %p316 = pneg %p206
      %p317 = pneg %p235
      %p318 = pneg %p232
      %s319 = smul.u32 16, %s20
      %p320 = scmp.lt.s32.totalorder %s319, 31
      %s321 = scalar_select %p320, %s319, 31
      %s322 = smul.addr %s321, 8
      %s323 = scalar_lea.vmem %s9, %s322
      %s324 = smul.u32 16, %s20
      %p325 = scmp.lt.s32.totalorder %s324, 31
      %s326 = scalar_select %p325, %s324, 31
      %s327 = smul.addr %s326, 8
      %s328 = scalar_lea.vmem %s0, %s327
      %s329 = smul.u32 16, %s20
      %s330 = smul.u32 16, %s20
      %p331 = scmp.lt.s32.totalorder %s330, 31
      %s332 = scalar_select %p331, %s330, 31
      %s333 = smul.addr %s332, 8
      %s334 = scalar_lea.vmem %s9, %s333
      %s335 = smul.u32 16, %s20
      %v336 = vld [vmem:[%s328] sm:$0xff]
      %v337 = vld [vmem:[%s328 + $0x8] sm:$0xff]
      %v338 = vld [vmem:[%s328 + $0x10] sm:$0xff]
      %v339 = vld [vmem:[%s328 + $0x18] sm:$0xff]
      %v340 = vld [vmem:[%s328 + $0x20] sm:$0xff]
      %v341 = vld [vmem:[%s328 + $0x28] sm:$0xff]
      %v342 = vld [vmem:[%s328 + $0x30] sm:$0xff]
      %v343 = vld [vmem:[%s328 + $0x38] sm:$0xff]
      %v344 = vld [vmem:[%s328 + $0x40] sm:$0xff]
      %v345 = vld [vmem:[%s328 + $0x48] sm:$0xff]
      %v346 = vld [vmem:[%s328 + $0x50] sm:$0xff]
      %v347 = vld [vmem:[%s328 + $0x58] sm:$0xff]
      %v348 = vld [vmem:[%s328 + $0x60] sm:$0xff]
      %v349 = vld [vmem:[%s328 + $0x68] sm:$0xff]
      %v350 = vld [vmem:[%s328 + $0x70] sm:$0xff]
      %v351 = vld [vmem:[%s328 + $0x78] sm:$0xff]
      %v352 = vld [vmem:[%s1] sm:$0xff]
      %v353 = vld [vmem:[%s1 + $0x8] sm:$0xff]
      %v354 = vld [vmem:[%s1 + $0x10] sm:$0xff]
      %v355 = vld [vmem:[%s1 + $0x18] sm:$0xff]
      %v356 = vld [vmem:[%s1 + $0x20] sm:$0xff]
      %v357 = vld [vmem:[%s1 + $0x28] sm:$0xff]
      %v358 = vld [vmem:[%s1 + $0x30] sm:$0xff]
      %v359 = vld [vmem:[%s1 + $0x38] sm:$0xff]
      %v360 = vld [vmem:[%s1 + $0x40] sm:$0xff]
      %v361 = vld [vmem:[%s1 + $0x48] sm:$0xff]
      %v362 = vld [vmem:[%s1 + $0x50] sm:$0xff]
      %v363 = vld [vmem:[%s1 + $0x58] sm:$0xff]
      %v364 = vld [vmem:[%s1 + $0x60] sm:$0xff]
      %v365 = vld [vmem:[%s1 + $0x68] sm:$0xff]
      %v366 = vld [vmem:[%s1 + $0x70] sm:$0xff]
      %v367 = vld [vmem:[%s1 + $0x78] sm:$0xff]
      %v368 = vld [vmem:[%s2] sm:$0x3]
      %v370 = vlaneseq
      %v371 = vshrl.u32 %v370, 7
      %v372 = vsub.s32 0, %v371
      %v373 = vrot.slane %v368, %v372
      %v374 = vlaneseq
      %v375 = vshrl.u32 %v374, 7
      %v376 = vsub.s32 1, %v375
      %v377 = vrot.slane %v368, %v376
      %vm380 = vcmask 523264
      %v382 = vsel %vm380, %v336, 0
      %v385 = vsel %vm380, %v337, 0
      %v388 = vsel %vm380, %v338, 0
      %v391 = vsel %vm380, %v339, 0
      %v394 = vsel %vm380, %v340, 0
      %v397 = vsel %vm380, %v341, 0
      %v400 = vsel %vm380, %v342, 0
      %v403 = vsel %vm380, %v343, 0
      %v406 = vsel %vm380, %v344, 0
      %v409 = vsel %vm380, %v345, 0
      %v412 = vsel %vm380, %v346, 0
      %v415 = vsel %vm380, %v347, 0
      %v418 = vsel %vm380, %v348, 0
      %v421 = vsel %vm380, %v349, 0
      %v424 = vsel %vm380, %v350, 0
      %v427 = vsel %vm380, %v351, 0
      %429 = vmatprep.subr.mxu0 %v353
      %430 = vmatpush1.msra.mxu0 %v352
      %431 = vmatprep.subr.mxu0 %v355
      %432 = vmatpush1.msra.mxu0 %v354
      %433 = vmatprep.subr.mxu0 %v357
      %434 = vmatpush1.msra.mxu0 %v356
      %435 = vmatprep.subr.mxu0 %v359
      %436 = vmatpush1.msra.mxu0 %v358
      %437 = vmatprep.subr.mxu0 %v361
      %438 = vmatpush1.msra.mxu0 %v360
      %439 = vmatprep.subr.mxu0 %v363
      %440 = vmatpush1.msra.mxu0 %v362
      %441 = vmatprep.subr.mxu0 %v365
      %442 = vmatpush1.msra.mxu0 %v364
      %443 = vmatprep.subr.mxu0 %v367
      %444 = vmatpush1.msra.mxu0 %v366
      %445 = vmatprep.subr.mxu0 0.0
      %446 = vmatpush1.msra.mxu0 0.0
      %447 = vmatprep.subr.mxu0 0.0
      %448 = vmatpush1.msra.mxu0 0.0
      %449 = vmatprep.subr.mxu0 0.0
      %450 = vmatpush1.msra.mxu0 0.0
      %451 = vmatprep.subr.mxu0 0.0
      %452 = vmatpush1.msra.mxu0 0.0
      %453 = vmatprep.subr.mxu0 0.0
      %454 = vmatpush1.msra.mxu0 0.0
      %455 = vmatprep.subr.mxu0 0.0
      %456 = vmatpush1.msra.mxu0 0.0
      %457 = vmatprep.subr.mxu0 0.0
      %458 = vmatpush1.msra.mxu0 0.0
      %459 = vmatprep.subr.mxu0 0.0
      %460 = vmatpush1.msra.mxu0 0.0
      %461 = vmatprep.subr.mxu0 0.0
      %462 = vmatpush1.msra.mxu0 0.0
      %463 = vmatprep.subr.mxu0 0.0
      %464 = vmatpush1.msra.mxu0 0.0
      %465 = vmatprep.subr.mxu0 0.0
      %466 = vmatpush1.msra.mxu0 0.0
      %467 = vmatprep.subr.mxu0 0.0
      %468 = vmatpush1.msra.mxu0 0.0
      %469 = vmatprep.subr.mxu0 0.0
      %470 = vmatpush1.msra.mxu0 0.0
      %471 = vmatprep.subr.mxu0 0.0
      %472 = vmatpush1.msra.mxu0 0.0
      %473 = vmatprep.subr.mxu0 0.0
      %474 = vmatpush1.msra.mxu0 0.0
      %475 = vmatprep.subr.mxu0 0.0
      %476 = vmatpush1.msra.mxu0 0.0
      %477 = vmatprep.subr.mxu0 0.0
      %478 = vmatpush1.msra.mxu0 0.0
      %479 = vmatprep.subr.mxu0 0.0
      %480 = vmatpush1.msra.mxu0 0.0
      %481 = vmatprep.subr.mxu0 0.0
      %482 = vmatpush1.msra.mxu0 0.0
      %483 = vmatprep.subr.mxu0 0.0
      %484 = vmatpush1.msra.mxu0 0.0
      %485 = vmatprep.subr.mxu0 0.0
      %486 = vmatpush1.msra.mxu0 0.0
      %487 = vmatprep.subr.mxu0 0.0
      %488 = vmatpush1.msra.mxu0 0.0
      %489 = vmatprep.subr.mxu0 0.0
      %490 = vmatpush1.msra.mxu0 0.0
      %491 = vmatprep.subr.mxu0 0.0
      %492 = vmatpush1.msra.mxu0 0.0
      %493 = vmatprep.mubr.f32.mxu0 0.0
      %494 = vmatmul.mubr.f32.gmra.mrb[0].mxu0 %v382
      %v495 = vpop.f32.mrb[0].mxu0
      %v496 = vadd.f32 %v373, %v495
      %v497 = vpop.f32.mrb[0].mxu0
      %v498 = vadd.f32 %v377, %v497
      %499 = vmatprep.mubr.f32.mxu0 0.0
      %500 = vmatmul.mubr.f32.gmra.mrb[0].mxu0 %v385
      %v501 = vpop.f32.mrb[0].mxu0
      %v502 = vadd.f32 %v373, %v501
      %v503 = vpop.f32.mrb[0].mxu0
      %v504 = vadd.f32 %v377, %v503
      %505 = vmatprep.mubr.f32.mxu0 0.0
      %506 = vmatmul.mubr.f32.gmra.mrb[0].mxu0 %v388
      %v507 = vpop.f32.mrb[0].mxu0
      %v508 = vadd.f32 %v373, %v507
      %v509 = vpop.f32.mrb[0].mxu0
      %v510 = vadd.f32 %v377, %v509
      %511 = vmatprep.mubr.f32.mxu0 0.0
      %512 = vmatmul.mubr.f32.gmra.mrb[0].mxu0 %v391
      %v513 = vpop.f32.mrb[0].mxu0
      %v514 = vadd.f32 %v373, %v513
      %v515 = vpop.f32.mrb[0].mxu0
      %v516 = vadd.f32 %v377, %v515
      %517 = vmatprep.mubr.f32.mxu0 0.0
      %518 = vmatmul.mubr.f32.gmra.mrb[0].mxu0 %v394
      %v519 = vpop.f32.mrb[0].mxu0
      %v520 = vadd.f32 %v373, %v519
      %v521 = vpop.f32.mrb[0].mxu0
      %v522 = vadd.f32 %v377, %v521
      %523 = vmatprep.mubr.f32.mxu0 0.0
      %524 = vmatmul.mubr.f32.gmra.mrb[0].mxu0 %v397
      %v525 = vpop.f32.mrb[0].mxu0
      %v526 = vadd.f32 %v373, %v525
      %v527 = vpop.f32.mrb[0].mxu0
      %v528 = vadd.f32 %v377, %v527
      %529 = vmatprep.mubr.f32.mxu0 0.0
      %530 = vmatmul.mubr.f32.gmra.mrb[0].mxu0 %v400
      %v531 = vpop.f32.mrb[0].mxu0
      %v532 = vadd.f32 %v373, %v531
      %v533 = vpop.f32.mrb[0].mxu0
      %v534 = vadd.f32 %v377, %v533
      %535 = vmatprep.mubr.f32.mxu0 0.0
      %536 = vmatmul.mubr.f32.gmra.mrb[0].mxu0 %v403
      %v537 = vpop.f32.mrb[0].mxu0
      %v538 = vadd.f32 %v373, %v537
      %v539 = vpop.f32.mrb[0].mxu0
      %v540 = vadd.f32 %v377, %v539
      %541 = vmatprep.mubr.f32.mxu0 0.0
      %542 = vmatmul.mubr.f32.gmra.mrb[0].mxu0 %v406
      %v543 = vpop.f32.mrb[0].mxu0
      %v544 = vadd.f32 %v373, %v543
      %v545 = vpop.f32.mrb[0].mxu0
      %v546 = vadd.f32 %v377, %v545
      %547 = vmatprep.mubr.f32.mxu0 0.0
      %548 = vmatmul.mubr.f32.gmra.mrb[0].mxu0 %v409
      %v549 = vpop.f32.mrb[0].mxu0
      %v550 = vadd.f32 %v373, %v549
      %v551 = vpop.f32.mrb[0].mxu0
      %v552 = vadd.f32 %v377, %v551
      %553 = vmatprep.mubr.f32.mxu0 0.0
      %554 = vmatmul.mubr.f32.gmra.mrb[0].mxu0 %v412
      %v555 = vpop.f32.mrb[0].mxu0
      %v556 = vadd.f32 %v373, %v555
      %v557 = vpop.f32.mrb[0].mxu0
      %v558 = vadd.f32 %v377, %v557
      %559 = vmatprep.mubr.f32.mxu0 0.0
      %560 = vmatmul.mubr.f32.gmra.mrb[0].mxu0 %v415
      %v561 = vpop.f32.mrb[0].mxu0
      %v562 = vadd.f32 %v373, %v561
      %v563 = vpop.f32.mrb[0].mxu0
      %v564 = vadd.f32 %v377, %v563
      %565 = vmatprep.mubr.f32.mxu0 0.0
      %566 = vmatmul.mubr.f32.gmra.mrb[0].mxu0 %v418
      %v567 = vpop.f32.mrb[0].mxu0
      %v568 = vadd.f32 %v373, %v567
      %v569 = vpop.f32.mrb[0].mxu0
      %v570 = vadd.f32 %v377, %v569
      %571 = vmatprep.mubr.f32.mxu0 0.0
      %572 = vmatmul.mubr.f32.gmra.mrb[0].mxu0 %v421
      %v573 = vpop.f32.mrb[0].mxu0
      %v574 = vadd.f32 %v373, %v573
      %v575 = vpop.f32.mrb[0].mxu0
      %v576 = vadd.f32 %v377, %v575
      %577 = vmatprep.mubr.f32.mxu0 0.0
      %578 = vmatmul.mubr.f32.gmra.mrb[0].mxu0 %v424
      %v579 = vpop.f32.mrb[0].mxu0
      %v580 = vadd.f32 %v373, %v579
      %v581 = vpop.f32.mrb[0].mxu0
      %v582 = vadd.f32 %v377, %v581
      %583 = vmatprep.mubr.f32.mxu0 0.0
      %584 = vmatmul.mubr.f32.gmra.mrb[0].mxu0 %v427
      %v585 = vpop.f32.mrb[0].mxu0
      %v586 = vadd.f32 %v373, %v585
      %v587 = vpop.f32.mrb[0].mxu0
      %v588 = vadd.f32 %v377, %v587
      %589 = vdwg.mxu0
      %v590 = vmax.f32 %v496, 0.0
      %v591 = vmax.f32 %v498, 0.0
      %v592 = vmax.f32 %v502, 0.0
      %v593 = vmax.f32 %v504, 0.0
      %v594 = vmax.f32 %v508, 0.0
      %v595 = vmax.f32 %v510, 0.0
      %v596 = vmax.f32 %v514, 0.0
      %v597 = vmax.f32 %v516, 0.0
      %v598 = vmax.f32 %v520, 0.0
      %v599 = vmax.f32 %v522, 0.0
      %v600 = vmax.f32 %v526, 0.0
      %v601 = vmax.f32 %v528, 0.0
      %v602 = vmax.f32 %v532, 0.0
      %v603 = vmax.f32 %v534, 0.0
      %v604 = vmax.f32 %v538, 0.0
      %v605 = vmax.f32 %v540, 0.0
      %v606 = vmax.f32 %v544, 0.0
      %v607 = vmax.f32 %v546, 0.0
      %v608 = vmax.f32 %v550, 0.0
      %v609 = vmax.f32 %v552, 0.0
      %v610 = vmax.f32 %v556, 0.0
      %v611 = vmax.f32 %v558, 0.0
      %v612 = vmax.f32 %v562, 0.0
      %v613 = vmax.f32 %v564, 0.0
      %v614 = vmax.f32 %v568, 0.0
      %v615 = vmax.f32 %v570, 0.0
      %v616 = vmax.f32 %v574, 0.0
      %v617 = vmax.f32 %v576, 0.0
      %v618 = vmax.f32 %v580, 0.0
      %v619 = vmax.f32 %v582, 0.0
      %v620 = vmax.f32 %v586, 0.0
      %v621 = vmax.f32 %v588, 0.0
      %v622 = vld [vmem:[%s3] sm:$0xff]
      %v623 = vld [vmem:[%s3 + $0x8] sm:$0xff]
      %v624 = vld [vmem:[%s3 + $0x10] sm:$0xff]
      %v625 = vld [vmem:[%s3 + $0x18] sm:$0xff]
      %v626 = vld [vmem:[%s3 + $0x20] sm:$0xff]
      %v627 = vld [vmem:[%s3 + $0x28] sm:$0xff]
      %v628 = vld [vmem:[%s3 + $0x30] sm:$0xff]
      %v629 = vld [vmem:[%s3 + $0x38] sm:$0xff]
      %v630 = vld [vmem:[%s3 + $0x40] sm:$0xff]
      %v631 = vld [vmem:[%s3 + $0x48] sm:$0xff]
      %v632 = vld [vmem:[%s3 + $0x50] sm:$0xff]
      %v633 = vld [vmem:[%s3 + $0x58] sm:$0xff]
      %v634 = vld [vmem:[%s3 + $0x60] sm:$0xff]
      %v635 = vld [vmem:[%s3 + $0x68] sm:$0xff]
      %v636 = vld [vmem:[%s3 + $0x70] sm:$0xff]
      %v637 = vld [vmem:[%s3 + $0x78] sm:$0xff]
      %v638 = vld [vmem:[%s3 + $0x80] sm:$0xff]
      %v639 = vld [vmem:[%s3 + $0x88] sm:$0xff]
      %v640 = vld [vmem:[%s3 + $0x90] sm:$0xff]
      %v641 = vld [vmem:[%s3 + $0x98] sm:$0xff]
      %v642 = vld [vmem:[%s3 + $0xa0] sm:$0xff]
      %v643 = vld [vmem:[%s3 + $0xa8] sm:$0xff]
      %v644 = vld [vmem:[%s3 + $0xb0] sm:$0xff]
      %v645 = vld [vmem:[%s3 + $0xb8] sm:$0xff]
      %v646 = vld [vmem:[%s3 + $0xc0] sm:$0xff]
      %v647 = vld [vmem:[%s3 + $0xc8] sm:$0xff]
      %v648 = vld [vmem:[%s3 + $0xd0] sm:$0xff]
      %v649 = vld [vmem:[%s3 + $0xd8] sm:$0xff]
      %v650 = vld [vmem:[%s3 + $0xe0] sm:$0xff]
      %v651 = vld [vmem:[%s3 + $0xe8] sm:$0xff]
      %v652 = vld [vmem:[%s3 + $0xf0] sm:$0xff]
      %v653 = vld [vmem:[%s3 + $0xf8] sm:$0xff]
      %v654 = vld [vmem:[%s4] sm:$0x1]
      %v656 = vlaneseq
      %v657 = vshrl.u32 %v656, 7
      %v658 = vsub.s32 0, %v657
      %v659 = vrot.slane %v654, %v658
      %661 = vmatprep.subr.mxu0 0.0
      %662 = vmatpush1.msra.mxu0 %v622
      %663 = vmatprep.subr.mxu0 0.0
      %664 = vmatpush1.msra.mxu0 %v623
      %665 = vmatprep.subr.mxu0 0.0
      %666 = vmatpush1.msra.mxu0 %v624
      %667 = vmatprep.subr.mxu0 0.0
      %668 = vmatpush1.msra.mxu0 %v625
      %669 = vmatprep.subr.mxu0 0.0
      %670 = vmatpush1.msra.mxu0 %v626
      %671 = vmatprep.subr.mxu0 0.0
      %672 = vmatpush1.msra.mxu0 %v627
      %673 = vmatprep.subr.mxu0 0.0
      %674 = vmatpush1.msra.mxu0 %v628
      %675 = vmatprep.subr.mxu0 0.0
      %676 = vmatpush1.msra.mxu0 %v629
      %677 = vmatprep.subr.mxu0 0.0
      %678 = vmatpush1.msra.mxu0 %v630
      %679 = vmatprep.subr.mxu0 0.0
      %680 = vmatpush1.msra.mxu0 %v631
      %681 = vmatprep.subr.mxu0 0.0
      %682 = vmatpush1.msra.mxu0 %v632
      %683 = vmatprep.subr.mxu0 0.0
      %684 = vmatpush1.msra.mxu0 %v633
      %685 = vmatprep.subr.mxu0 0.0
      %686 = vmatpush1.msra.mxu0 %v634
      %687 = vmatprep.subr.mxu0 0.0
      %688 = vmatpush1.msra.mxu0 %v635
      %689 = vmatprep.subr.mxu0 0.0
      %690 = vmatpush1.msra.mxu0 %v636
      %691 = vmatprep.subr.mxu0 0.0
      %692 = vmatpush1.msra.mxu0 %v637
      %693 = vmatprep.subr.mxu0 0.0
      %694 = vmatpush1.msra.mxu0 %v638
      %695 = vmatprep.subr.mxu0 0.0
      %696 = vmatpush1.msra.mxu0 %v639
      %697 = vmatprep.subr.mxu0 0.0
      %698 = vmatpush1.msra.mxu0 %v640
      %699 = vmatprep.subr.mxu0 0.0
      %700 = vmatpush1.msra.mxu0 %v641
      %701 = vmatprep.subr.mxu0 0.0
      %702 = vmatpush1.msra.mxu0 %v642
      %703 = vmatprep.subr.mxu0 0.0
      %704 = vmatpush1.msra.mxu0 %v643
      %705 = vmatprep.subr.mxu0 0.0
      %706 = vmatpush1.msra.mxu0 %v644
      %707 = vmatprep.subr.mxu0 0.0
      %708 = vmatpush1.msra.mxu0 %v645
      %709 = vmatprep.subr.mxu0 0.0
      %710 = vmatpush1.msra.mxu0 %v646
      %711 = vmatprep.subr.mxu0 0.0
      %712 = vmatpush1.msra.mxu0 %v647
      %713 = vmatprep.subr.mxu0 0.0
      %714 = vmatpush1.msra.mxu0 %v648
      %715 = vmatprep.subr.mxu0 0.0
      %716 = vmatpush1.msra.mxu0 %v649
      %717 = vmatprep.subr.mxu0 0.0
      %718 = vmatpush1.msra.mxu0 %v650
      %719 = vmatprep.subr.mxu0 0.0
      %720 = vmatpush1.msra.mxu0 %v651
      %721 = vmatprep.subr.mxu0 0.0
      %722 = vmatpush1.msra.mxu0 %v652
      %723 = vmatprep.subr.mxu0 0.0
      %724 = vmatpush1.msra.mxu0 %v653
      %725 = vmatprep.mubr.f32.mxu0 %v591
      %726 = vmatmul.mubr.f32.gmra.mrb[0].mxu0 %v590
      %v727 = vpop.f32.mrb[0].mxu0
      %v728 = vadd.f32 %v659, %v727
      %v729 = vpop.f32.mrb[0].mxu0
      %730 = vmatprep.mubr.f32.mxu0 %v593
      %731 = vmatmul.mubr.f32.gmra.mrb[0].mxu0 %v592
      %v732 = vpop.f32.mrb[0].mxu0
      %v733 = vadd.f32 %v659, %v732
      %v734 = vpop.f32.mrb[0].mxu0
      %735 = vmatprep.mubr.f32.mxu0 %v595
      %736 = vmatmul.mubr.f32.gmra.mrb[0].mxu0 %v594
      %v737 = vpop.f32.mrb[0].mxu0
      %v738 = vadd.f32 %v659, %v737
      %v739 = vpop.f32.mrb[0].mxu0
      %740 = vmatprep.mubr.f32.mxu0 %v597
      %741 = vmatmul.mubr.f32.gmra.mrb[0].mxu0 %v596
      %v742 = vpop.f32.mrb[0].mxu0
      %v743 = vadd.f32 %v659, %v742
      %v744 = vpop.f32.mrb[0].mxu0
      %745 = vmatprep.mubr.f32.mxu0 %v599
      %746 = vmatmul.mubr.f32.gmra.mrb[0].mxu0 %v598
      %v747 = vpop.f32.mrb[0].mxu0
      %v748 = vadd.f32 %v659, %v747
      %v749 = vpop.f32.mrb[0].mxu0
      %750 = vmatprep.mubr.f32.mxu0 %v601
      %751 = vmatmul.mubr.f32.gmra.mrb[0].mxu0 %v600
      %v752 = vpop.f32.mrb[0].mxu0
      %v753 = vadd.f32 %v659, %v752
      %v754 = vpop.f32.mrb[0].mxu0
      %755 = vmatprep.mubr.f32.mxu0 %v603
      %756 = vmatmul.mubr.f32.gmra.mrb[0].mxu0 %v602
      %v757 = vpop.f32.mrb[0].mxu0
      %v758 = vadd.f32 %v659, %v757
      %v759 = vpop.f32.mrb[0].mxu0
      %760 = vmatprep.mubr.f32.mxu0 %v605
      %761 = vmatmul.mubr.f32.gmra.mrb[0].mxu0 %v604
      %v762 = vpop.f32.mrb[0].mxu0
      %v763 = vadd.f32 %v659, %v762
      %v764 = vpop.f32.mrb[0].mxu0
      %765 = vmatprep.mubr.f32.mxu0 %v607
      %766 = vmatmul.mubr.f32.gmra.mrb[0].mxu0 %v606
      %v767 = vpop.f32.mrb[0].mxu0
      %v768 = vadd.f32 %v659, %v767
      %v769 = vpop.f32.mrb[0].mxu0
      %770 = vmatprep.mubr.f32.mxu0 %v609
      %771 = vmatmul.mubr.f32.gmra.mrb[0].mxu0 %v608
      %v772 = vpop.f32.mrb[0].mxu0
      %v773 = vadd.f32 %v659, %v772
      %v774 = vpop.f32.mrb[0].mxu0
      %775 = vmatprep.mubr.f32.mxu0 %v611
      %776 = vmatmul.mubr.f32.gmra.mrb[0].mxu0 %v610
      %v777 = vpop.f32.mrb[0].mxu0
      %v778 = vadd.f32 %v659, %v777
      %v779 = vpop.f32.mrb[0].mxu0
      %780 = vmatprep.mubr.f32.mxu0 %v613
      %781 = vmatmul.mubr.f32.gmra.mrb[0].mxu0 %v612
      %v782 = vpop.f32.mrb[0].mxu0
      %v783 = vadd.f32 %v659, %v782
      %v784 = vpop.f32.mrb[0].mxu0
      %785 = vmatprep.mubr.f32.mxu0 %v615
      %786 = vmatmul.mubr.f32.gmra.mrb[0].mxu0 %v614
      %v787 = vpop.f32.mrb[0].mxu0
      %v788 = vadd.f32 %v659, %v787
      %v789 = vpop.f32.mrb[0].mxu0
      %790 = vmatprep.mubr.f32.mxu0 %v617
      %791 = vmatmul.mubr.f32.gmra.mrb[0].mxu0 %v616
      %v792 = vpop.f32.mrb[0].mxu0
      %v793 = vadd.f32 %v659, %v792
      %v794 = vpop.f32.mrb[0].mxu0
      %795 = vmatprep.mubr.f32.mxu0 %v619
      %796 = vmatmul.mubr.f32.gmra.mrb[0].mxu0 %v618
      %v797 = vpop.f32.mrb[0].mxu0
      %v798 = vadd.f32 %v659, %v797
      %v799 = vpop.f32.mrb[0].mxu0
      %800 = vmatprep.mubr.f32.mxu0 %v621
      %801 = vmatmul.mubr.f32.gmra.mrb[0].mxu0 %v620
      %v802 = vpop.f32.mrb[0].mxu0
      %v803 = vadd.f32 %v659, %v802
      %v804 = vpop.f32.mrb[0].mxu0
      %805 = vdwg.mxu0
      %v806 = vmax.f32 %v728, 0.0
      %v807 = vmax.f32 %v733, 0.0
      %v808 = vmax.f32 %v738, 0.0
      %v809 = vmax.f32 %v743, 0.0
      %v810 = vmax.f32 %v748, 0.0
      %v811 = vmax.f32 %v753, 0.0
      %v812 = vmax.f32 %v758, 0.0
      %v813 = vmax.f32 %v763, 0.0
      %v814 = vmax.f32 %v768, 0.0
      %v815 = vmax.f32 %v773, 0.0
      %v816 = vmax.f32 %v778, 0.0
      %v817 = vmax.f32 %v783, 0.0
      %v818 = vmax.f32 %v788, 0.0
      %v819 = vmax.f32 %v793, 0.0
      %v820 = vmax.f32 %v798, 0.0
      %v821 = vmax.f32 %v803, 0.0
      %v822 = vld [vmem:[%s5] sm:$0xff]
      %v823 = vld [vmem:[%s5 + $0x8] sm:$0xff]
      %v824 = vld [vmem:[%s5 + $0x10] sm:$0xff]
      %v825 = vld [vmem:[%s5 + $0x18] sm:$0xff]
      %v826 = vld [vmem:[%s6] sm:$0x1]
      %v828 = vlaneseq
      %v829 = vshrl.u32 %v828, 7
      %v830 = vsub.s32 0, %v829
      %v831 = vrot.slane %v826, %v830
      %vm833 = vcmask 261120
      %v835 = vsel %vm833, %v806, 0
      %v838 = vsel %vm833, %v807, 0
      %v841 = vsel %vm833, %v808, 0
      %v844 = vsel %vm833, %v809, 0
      %v847 = vsel %vm833, %v810, 0
      %v850 = vsel %vm833, %v811, 0
      %v853 = vsel %vm833, %v812, 0
      %v856 = vsel %vm833, %v813, 0
      %v859 = vsel %vm833, %v814, 0
      %v862 = vsel %vm833, %v815, 0
      %v865 = vsel %vm833, %v816, 0
      %v868 = vsel %vm833, %v817, 0
      %v871 = vsel %vm833, %v818, 0
      %v874 = vsel %vm833, %v819, 0
      %v877 = vsel %vm833, %v820, 0
      %v880 = vsel %vm833, %v821, 0
      %882 = vmatprep.subr.mxu0 0.0
      %883 = vmatpush1.msra.mxu0 %v822
      %884 = vmatprep.subr.mxu0 0.0
      %885 = vmatpush1.msra.mxu0 %v823
      %886 = vmatprep.subr.mxu0 0.0
      %887 = vmatpush1.msra.mxu0 %v824
      %888 = vmatprep.subr.mxu0 0.0
      %889 = vmatpush1.msra.mxu0 %v825
      %890 = vmatprep.subr.mxu0 0.0
      %891 = vmatpush1.msra.mxu0 0.0
      %892 = vmatprep.subr.mxu0 0.0
      %893 = vmatpush1.msra.mxu0 0.0
      %894 = vmatprep.subr.mxu0 0.0
      %895 = vmatpush1.msra.mxu0 0.0
      %896 = vmatprep.subr.mxu0 0.0
      %897 = vmatpush1.msra.mxu0 0.0
      %898 = vmatprep.subr.mxu0 0.0
      %899 = vmatpush1.msra.mxu0 0.0
      %900 = vmatprep.subr.mxu0 0.0
      %901 = vmatpush1.msra.mxu0 0.0
      %902 = vmatprep.subr.mxu0 0.0
      %903 = vmatpush1.msra.mxu0 0.0
      %904 = vmatprep.subr.mxu0 0.0
      %905 = vmatpush1.msra.mxu0 0.0
      %906 = vmatprep.subr.mxu0 0.0
      %907 = vmatpush1.msra.mxu0 0.0
      %908 = vmatprep.subr.mxu0 0.0
      %909 = vmatpush1.msra.mxu0 0.0
      %910 = vmatprep.subr.mxu0 0.0
      %911 = vmatpush1.msra.mxu0 0.0
      %912 = vmatprep.subr.mxu0 0.0
      %913 = vmatpush1.msra.mxu0 0.0
      %914 = vmatprep.subr.mxu0 0.0
      %915 = vmatpush1.msra.mxu0 0.0
      %916 = vmatprep.subr.mxu0 0.0
      %917 = vmatpush1.msra.mxu0 0.0
      %918 = vmatprep.subr.mxu0 0.0
      %919 = vmatpush1.msra.mxu0 0.0
      %920 = vmatprep.subr.mxu0 0.0
      %921 = vmatpush1.msra.mxu0 0.0
      %922 = vmatprep.subr.mxu0 0.0
      %923 = vmatpush1.msra.mxu0 0.0
      %924 = vmatprep.subr.mxu0 0.0
      %925 = vmatpush1.msra.mxu0 0.0
      %926 = vmatprep.subr.mxu0 0.0
      %927 = vmatpush1.msra.mxu0 0.0
      %928 = vmatprep.subr.mxu0 0.0
      %929 = vmatpush1.msra.mxu0 0.0
      %930 = vmatprep.subr.mxu0 0.0
      %931 = vmatpush1.msra.mxu0 0.0
      %932 = vmatprep.subr.mxu0 0.0
      %933 = vmatpush1.msra.mxu0 0.0
      %934 = vmatprep.subr.mxu0 0.0
      %935 = vmatpush1.msra.mxu0 0.0
      %936 = vmatprep.subr.mxu0 0.0
      %937 = vmatpush1.msra.mxu0 0.0
      %938 = vmatprep.subr.mxu0 0.0
      %939 = vmatpush1.msra.mxu0 0.0
      %940 = vmatprep.subr.mxu0 0.0
      %941 = vmatpush1.msra.mxu0 0.0
      %942 = vmatprep.subr.mxu0 0.0
      %943 = vmatpush1.msra.mxu0 0.0
      %944 = vmatprep.subr.mxu0 0.0
      %945 = vmatpush1.msra.mxu0 0.0
      %946 = vmatprep.mubr.f32.mxu0 0.0
      %947 = vmatmul.mubr.f32.gmra.mrb[0].mxu0 %v835
      %v948 = vpop.f32.mrb[0].mxu0
      %v949 = vadd.f32 %v831, %v948
      %v950 = vpop.f32.mrb[0].mxu0
      %951 = vmatprep.mubr.f32.mxu0 0.0
      %952 = vmatmul.mubr.f32.gmra.mrb[0].mxu0 %v838
      %v953 = vpop.f32.mrb[0].mxu0
      %v954 = vadd.f32 %v831, %v953
      %v955 = vpop.f32.mrb[0].mxu0
      %956 = vmatprep.mubr.f32.mxu0 0.0
      %957 = vmatmul.mubr.f32.gmra.mrb[0].mxu0 %v841
      %v958 = vpop.f32.mrb[0].mxu0
      %v959 = vadd.f32 %v831, %v958
      %v960 = vpop.f32.mrb[0].mxu0
      %961 = vmatprep.mubr.f32.mxu0 0.0
      %962 = vmatmul.mubr.f32.gmra.mrb[0].mxu0 %v844
      %v963 = vpop.f32.mrb[0].mxu0
      %v964 = vadd.f32 %v831, %v963
      %v965 = vpop.f32.mrb[0].mxu0
      %966 = vmatprep.mubr.f32.mxu0 0.0
      %967 = vmatmul.mubr.f32.gmra.mrb[0].mxu0 %v847
      %v968 = vpop.f32.mrb[0].mxu0
      %v969 = vadd.f32 %v831, %v968
      %v970 = vpop.f32.mrb[0].mxu0
      %971 = vmatprep.mubr.f32.mxu0 0.0
      %972 = vmatmul.mubr.f32.gmra.mrb[0].mxu0 %v850
      %v973 = vpop.f32.mrb[0].mxu0
      %v974 = vadd.f32 %v831, %v973
      %v975 = vpop.f32.mrb[0].mxu0
      %976 = vmatprep.mubr.f32.mxu0 0.0
      %977 = vmatmul.mubr.f32.gmra.mrb[0].mxu0 %v853
      %v978 = vpop.f32.mrb[0].mxu0
      %v979 = vadd.f32 %v831, %v978
      %v980 = vpop.f32.mrb[0].mxu0
      %981 = vmatprep.mubr.f32.mxu0 0.0
      %982 = vmatmul.mubr.f32.gmra.mrb[0].mxu0 %v856
      %v983 = vpop.f32.mrb[0].mxu0
      %v984 = vadd.f32 %v831, %v983
      %v985 = vpop.f32.mrb[0].mxu0
      %986 = vmatprep.mubr.f32.mxu0 0.0
      %987 = vmatmul.mubr.f32.gmra.mrb[0].mxu0 %v859
      %v988 = vpop.f32.mrb[0].mxu0
      %v989 = vadd.f32 %v831, %v988
      %v990 = vpop.f32.mrb[0].mxu0
      %991 = vmatprep.mubr.f32.mxu0 0.0
      %992 = vmatmul.mubr.f32.gmra.mrb[0].mxu0 %v862
      %v993 = vpop.f32.mrb[0].mxu0
      %v994 = vadd.f32 %v831, %v993
      %v995 = vpop.f32.mrb[0].mxu0
      %996 = vmatprep.mubr.f32.mxu0 0.0
      %997 = vmatmul.mubr.f32.gmra.mrb[0].mxu0 %v865
      %v998 = vpop.f32.mrb[0].mxu0
      %v999 = vadd.f32 %v831, %v998
      %v1000 = vpop.f32.mrb[0].mxu0
      %1001 = vmatprep.mubr.f32.mxu0 0.0
      %1002 = vmatmul.mubr.f32.gmra.mrb[0].mxu0 %v868
      %v1003 = vpop.f32.mrb[0].mxu0
      %v1004 = vadd.f32 %v831, %v1003
      %v1005 = vpop.f32.mrb[0].mxu0
      %1006 = vmatprep.mubr.f32.mxu0 0.0
      %1007 = vmatmul.mubr.f32.gmra.mrb[0].mxu0 %v871
      %v1008 = vpop.f32.mrb[0].mxu0
      %v1009 = vadd.f32 %v831, %v1008
      %v1010 = vpop.f32.mrb[0].mxu0
      %1011 = vmatprep.mubr.f32.mxu0 0.0
      %1012 = vmatmul.mubr.f32.gmra.mrb[0].mxu0 %v874
      %v1013 = vpop.f32.mrb[0].mxu0
      %v1014 = vadd.f32 %v831, %v1013
      %v1015 = vpop.f32.mrb[0].mxu0
      %1016 = vmatprep.mubr.f32.mxu0 0.0
      %1017 = vmatmul.mubr.f32.gmra.mrb[0].mxu0 %v877
      %v1018 = vpop.f32.mrb[0].mxu0
      %v1019 = vadd.f32 %v831, %v1018
      %v1020 = vpop.f32.mrb[0].mxu0
      %1021 = vmatprep.mubr.f32.mxu0 0.0
      %1022 = vmatmul.mubr.f32.gmra.mrb[0].mxu0 %v880
      %v1023 = vpop.f32.mrb[0].mxu0
      %v1024 = vadd.f32 %v831, %v1023
      %v1025 = vpop.f32.mrb[0].mxu0
      %1026 = vdwg.mxu0
      %v1027 = vmax.f32 %v949, 0.0
      %v1028 = vmax.f32 %v954, 0.0
      %v1029 = vmax.f32 %v959, 0.0
      %v1030 = vmax.f32 %v964, 0.0
      %v1031 = vmax.f32 %v969, 0.0
      %v1032 = vmax.f32 %v974, 0.0
      %v1033 = vmax.f32 %v979, 0.0
      %v1034 = vmax.f32 %v984, 0.0
      %v1035 = vmax.f32 %v989, 0.0
      %v1036 = vmax.f32 %v994, 0.0
      %v1037 = vmax.f32 %v999, 0.0
      %v1038 = vmax.f32 %v1004, 0.0
      %v1039 = vmax.f32 %v1009, 0.0
      %v1040 = vmax.f32 %v1014, 0.0
      %v1041 = vmax.f32 %v1019, 0.0
      %v1042 = vmax.f32 %v1024, 0.0
      %v1043 = vld [vmem:[%s7] sm:$0xff]
      %v1044 = vld [vmem:[%s8] sm:$0x1]
      %v1046 = vlaneseq
      %v1047 = vshrl.u32 %v1046, 7
      %v1048 = vsub.s32 0, %v1047
      %v1049 = vrot.slane %v1044, %v1048
      %vm1051 = vcmask 64512
      %v1053 = vsel %vm1051, %v1027, 0
      %v1056 = vsel %vm1051, %v1028, 0
      %v1059 = vsel %vm1051, %v1029, 0
      %v1062 = vsel %vm1051, %v1030, 0
      %v1065 = vsel %vm1051, %v1031, 0
      %v1068 = vsel %vm1051, %v1032, 0
      %v1071 = vsel %vm1051, %v1033, 0
      %v1074 = vsel %vm1051, %v1034, 0
      %v1077 = vsel %vm1051, %v1035, 0
      %v1080 = vsel %vm1051, %v1036, 0
      %v1083 = vsel %vm1051, %v1037, 0
      %v1086 = vsel %vm1051, %v1038, 0
      %v1089 = vsel %vm1051, %v1039, 0
      %v1092 = vsel %vm1051, %v1040, 0
      %v1095 = vsel %vm1051, %v1041, 0
      %v1098 = vsel %vm1051, %v1042, 0
      %1100 = vmatprep.subr.mxu0 0.0
      %1101 = vmatpush1.msra.mxu0 %v1043
      %1102 = vmatprep.subr.mxu0 0.0
      %1103 = vmatpush1.msra.mxu0 0.0
      %1104 = vmatprep.subr.mxu0 0.0
      %1105 = vmatpush1.msra.mxu0 0.0
      %1106 = vmatprep.subr.mxu0 0.0
      %1107 = vmatpush1.msra.mxu0 0.0
      %1108 = vmatprep.subr.mxu0 0.0
      %1109 = vmatpush1.msra.mxu0 0.0
      %1110 = vmatprep.subr.mxu0 0.0
      %1111 = vmatpush1.msra.mxu0 0.0
      %1112 = vmatprep.subr.mxu0 0.0
      %1113 = vmatpush1.msra.mxu0 0.0
      %1114 = vmatprep.subr.mxu0 0.0
      %1115 = vmatpush1.msra.mxu0 0.0
      %1116 = vmatprep.subr.mxu0 0.0
      %1117 = vmatpush1.msra.mxu0 0.0
      %1118 = vmatprep.subr.mxu0 0.0
      %1119 = vmatpush1.msra.mxu0 0.0
      %1120 = vmatprep.subr.mxu0 0.0
      %1121 = vmatpush1.msra.mxu0 0.0
      %1122 = vmatprep.subr.mxu0 0.0
      %1123 = vmatpush1.msra.mxu0 0.0
      %1124 = vmatprep.subr.mxu0 0.0
      %1125 = vmatpush1.msra.mxu0 0.0
      %1126 = vmatprep.subr.mxu0 0.0
      %1127 = vmatpush1.msra.mxu0 0.0
      %1128 = vmatprep.subr.mxu0 0.0
      %1129 = vmatpush1.msra.mxu0 0.0
      %1130 = vmatprep.subr.mxu0 0.0
      %1131 = vmatpush1.msra.mxu0 0.0
      %1132 = vmatprep.subr.mxu0 0.0
      %1133 = vmatpush1.msra.mxu0 0.0
      %1134 = vmatprep.subr.mxu0 0.0
      %1135 = vmatpush1.msra.mxu0 0.0
      %1136 = vmatprep.subr.mxu0 0.0
      %1137 = vmatpush1.msra.mxu0 0.0
      %1138 = vmatprep.subr.mxu0 0.0
      %1139 = vmatpush1.msra.mxu0 0.0
      %1140 = vmatprep.subr.mxu0 0.0
      %1141 = vmatpush1.msra.mxu0 0.0
      %1142 = vmatprep.subr.mxu0 0.0
      %1143 = vmatpush1.msra.mxu0 0.0
      %1144 = vmatprep.subr.mxu0 0.0
      %1145 = vmatpush1.msra.mxu0 0.0
      %1146 = vmatprep.subr.mxu0 0.0
      %1147 = vmatpush1.msra.mxu0 0.0
      %1148 = vmatprep.subr.mxu0 0.0
      %1149 = vmatpush1.msra.mxu0 0.0
      %1150 = vmatprep.subr.mxu0 0.0
      %1151 = vmatpush1.msra.mxu0 0.0
      %1152 = vmatprep.subr.mxu0 0.0
      %1153 = vmatpush1.msra.mxu0 0.0
      %1154 = vmatprep.subr.mxu0 0.0
      %1155 = vmatpush1.msra.mxu0 0.0
      %1156 = vmatprep.subr.mxu0 0.0
      %1157 = vmatpush1.msra.mxu0 0.0
      %1158 = vmatprep.subr.mxu0 0.0
      %1159 = vmatpush1.msra.mxu0 0.0
      %1160 = vmatprep.subr.mxu0 0.0
      %1161 = vmatpush1.msra.mxu0 0.0
      %1162 = vmatprep.subr.mxu0 0.0
      %1163 = vmatpush1.msra.mxu0 0.0
      %1164 = vmatprep.mubr.f32.mxu0 0.0
      %1165 = vmatmul.mubr.f32.gmra.mrb[0].mxu0 %v1053
      %v1166 = vpop.f32.mrb[0].mxu0
      %v1167 = vadd.f32 %v1049, %v1166
      %v1168 = vpop.f32.mrb[0].mxu0
      %1169 = vmatprep.mubr.f32.mxu0 0.0
      %1170 = vmatmul.mubr.f32.gmra.mrb[0].mxu0 %v1056
      %v1171 = vpop.f32.mrb[0].mxu0
      %v1172 = vadd.f32 %v1049, %v1171
      %v1173 = vpop.f32.mrb[0].mxu0
      %1174 = vmatprep.mubr.f32.mxu0 0.0
      %1175 = vmatmul.mubr.f32.gmra.mrb[0].mxu0 %v1059
      %v1176 = vpop.f32.mrb[0].mxu0
      %v1177 = vadd.f32 %v1049, %v1176
      %v1178 = vpop.f32.mrb[0].mxu0
      %1179 = vmatprep.mubr.f32.mxu0 0.0
      %1180 = vmatmul.mubr.f32.gmra.mrb[0].mxu0 %v1062
      %v1181 = vpop.f32.mrb[0].mxu0
      %v1182 = vadd.f32 %v1049, %v1181
      %v1183 = vpop.f32.mrb[0].mxu0
      %1184 = vmatprep.mubr.f32.mxu0 0.0
      %1185 = vmatmul.mubr.f32.gmra.mrb[0].mxu0 %v1065
      %v1186 = vpop.f32.mrb[0].mxu0
      %v1187 = vadd.f32 %v1049, %v1186
      %v1188 = vpop.f32.mrb[0].mxu0
      %1189 = vmatprep.mubr.f32.mxu0 0.0
      %1190 = vmatmul.mubr.f32.gmra.mrb[0].mxu0 %v1068
      %v1191 = vpop.f32.mrb[0].mxu0
      %v1192 = vadd.f32 %v1049, %v1191
      %v1193 = vpop.f32.mrb[0].mxu0
      %1194 = vmatprep.mubr.f32.mxu0 0.0
      %1195 = vmatmul.mubr.f32.gmra.mrb[0].mxu0 %v1071
      %v1196 = vpop.f32.mrb[0].mxu0
      %v1197 = vadd.f32 %v1049, %v1196
      %v1198 = vpop.f32.mrb[0].mxu0
      %1199 = vmatprep.mubr.f32.mxu0 0.0
      %1200 = vmatmul.mubr.f32.gmra.mrb[0].mxu0 %v1074
      %v1201 = vpop.f32.mrb[0].mxu0
      %v1202 = vadd.f32 %v1049, %v1201
      %v1203 = vpop.f32.mrb[0].mxu0
      %1204 = vmatprep.mubr.f32.mxu0 0.0
      %1205 = vmatmul.mubr.f32.gmra.mrb[0].mxu0 %v1077
      %v1206 = vpop.f32.mrb[0].mxu0
      %v1207 = vadd.f32 %v1049, %v1206
      %v1208 = vpop.f32.mrb[0].mxu0
      %1209 = vmatprep.mubr.f32.mxu0 0.0
      %1210 = vmatmul.mubr.f32.gmra.mrb[0].mxu0 %v1080
      %v1211 = vpop.f32.mrb[0].mxu0
      %v1212 = vadd.f32 %v1049, %v1211
      %v1213 = vpop.f32.mrb[0].mxu0
      %1214 = vmatprep.mubr.f32.mxu0 0.0
      %1215 = vmatmul.mubr.f32.gmra.mrb[0].mxu0 %v1083
      %v1216 = vpop.f32.mrb[0].mxu0
      %v1217 = vadd.f32 %v1049, %v1216
      %v1218 = vpop.f32.mrb[0].mxu0
      %1219 = vmatprep.mubr.f32.mxu0 0.0
      %1220 = vmatmul.mubr.f32.gmra.mrb[0].mxu0 %v1086
      %v1221 = vpop.f32.mrb[0].mxu0
      %v1222 = vadd.f32 %v1049, %v1221
      %v1223 = vpop.f32.mrb[0].mxu0
      %1224 = vmatprep.mubr.f32.mxu0 0.0
      %1225 = vmatmul.mubr.f32.gmra.mrb[0].mxu0 %v1089
      %v1226 = vpop.f32.mrb[0].mxu0
      %v1227 = vadd.f32 %v1049, %v1226
      %v1228 = vpop.f32.mrb[0].mxu0
      %1229 = vmatprep.mubr.f32.mxu0 0.0
      %1230 = vmatmul.mubr.f32.gmra.mrb[0].mxu0 %v1092
      %v1231 = vpop.f32.mrb[0].mxu0
      %v1232 = vadd.f32 %v1049, %v1231
      %v1233 = vpop.f32.mrb[0].mxu0
      %1234 = vmatprep.mubr.f32.mxu0 0.0
      %1235 = vmatmul.mubr.f32.gmra.mrb[0].mxu0 %v1095
      %v1236 = vpop.f32.mrb[0].mxu0
      %v1237 = vadd.f32 %v1049, %v1236
      %v1238 = vpop.f32.mrb[0].mxu0
      %1239 = vmatprep.mubr.f32.mxu0 0.0
      %1240 = vmatmul.mubr.f32.gmra.mrb[0].mxu0 %v1098
      %v1241 = vpop.f32.mrb[0].mxu0
      %v1242 = vadd.f32 %v1049, %v1241
      %v1243 = vpop.f32.mrb[0].mxu0
      %1244 = vdwg.mxu0
      %vm1245 = vcmask 31744
      %1246 = vst.msk [vmem:[%s334] sm:$0xff] %vm1245, %v1167
      %1247 = vst.msk [vmem:[%s334 + $0x8] sm:$0xff] %vm1245, %v1172
      %1248 = vst.msk [vmem:[%s334 + $0x10] sm:$0xff] %vm1245, %v1177
      %1249 = vst.msk [vmem:[%s334 + $0x18] sm:$0xff] %vm1245, %v1182
      %1250 = vst.msk [vmem:[%s334 + $0x20] sm:$0xff] %vm1245, %v1187
      %1251 = vst.msk [vmem:[%s334 + $0x28] sm:$0xff] %vm1245, %v1192
      %1252 = vst.msk [vmem:[%s334 + $0x30] sm:$0xff] %vm1245, %v1197
      %1253 = vst.msk [vmem:[%s334 + $0x38] sm:$0xff] %vm1245, %v1202
      %1254 = vst.msk [vmem:[%s334 + $0x40] sm:$0xff] %vm1245, %v1207
      %1255 = vst.msk [vmem:[%s334 + $0x48] sm:$0xff] %vm1245, %v1212
      %1256 = vst.msk [vmem:[%s334 + $0x50] sm:$0xff] %vm1245, %v1217
      %1257 = vst.msk [vmem:[%s334 + $0x58] sm:$0xff] %vm1245, %v1222
      %1258 = vst.msk [vmem:[%s334 + $0x60] sm:$0xff] %vm1245, %v1227
      %1259 = vst.msk [vmem:[%s334 + $0x68] sm:$0xff] %vm1245, %v1232
      %1260 = vst.msk [vmem:[%s334 + $0x70] sm:$0xff] %vm1245, %v1237
      %1261 = vst.msk [vmem:[%s334 + $0x78] sm:$0xff] %vm1245, %v1242
      %s1262 = smul.u32 16, %s20
      %p1263 = scmp.lt.s32.totalorder %s1262, 31
      %s1264 = scalar_select %p1263, %s1262, 31
      %s1265 = smul.addr %s1264, 8
      %s1266 = scalar_lea.vmem %s9, %s1265
      // Predicated region
      $region57: #{tpu_custom_call.1} parent=55 // pred_check
        %p1267 = pneg %p232
      $region58: #{tpu_custom_call.1} parent=55 // pred_check_branch
        %1269 = sbr.rel (%p1267) target = $region60
      $region59: #{tpu_custom_call.1} parent=55 // pred_region
        %s1270 = smul.u32 16, %s20
      $region60: #{tpu_custom_call.1} parent=55 // pred_fallthru
        _
    $region56: #{tpu_custom_call.1} parent=5 // pred_fallthru
      _
    %p1271 = scmp.le.s32.totalorder 2, %s15
    // Predicated region
    $region61: #{tpu_custom_call.1} parent=5 // pred_check
      %p1272 = pneg %p1271
    $region62: #{tpu_custom_call.1} parent=5 // pred_check_branch
      %1274 = sbr.rel (%p1272) target = $region64
    $region63: #{tpu_custom_call.1} parent=5 // pred_region
      %s1275 = ssub.s32 %s15, 2
      // Predicated region
      $region65: #{tpu_custom_call.1} parent=63 // pred_check
        %p1276 = pneg %p238
      $region66: #{tpu_custom_call.1} parent=63 // pred_check_branch
        %1278 = sbr.rel (%p1276) target = $region68
      $region67: #{tpu_custom_call.1} parent=63 // pred_region
        %s1279 = smul.u32 16, %s21
        %p1280 = scmp.lt.s32.totalorder %s1279, 31
        %s1281 = scalar_select %p1280, %s1279, 31
        %s1282 = smul.addr %s1281, 8
        %s1283 = scalar_lea.vmem %s9, %s1282
      $region68: #{tpu_custom_call.1} parent=63 // pred_fallthru
        _
    $region64: #{tpu_custom_call.1} parent=5 // pred_fallthru
      _
  $region6: #{tpu_custom_call.1} parent=0 // loop_footer
    %s19 = sadd.s32 1, %s15
  $region7: #{tpu_custom_call.1} parent=0 // loop_footer_branch
    %14 = sbr.rel target = $region3
  $region8: #{tpu_custom_call.1} parent=0 // loop_exit
    _

</llo_original>
